<compile_context>
chip_gen: v6e
topology: v6e:2x2x1
jax: 0.10.0
libtpu: 0.0.40
codegen_flags: <defaults>
</compile_context>

<pallas_src>
import functools

import jax
import jax.numpy as jnp
from jax.experimental import pallas as pl
from jax.experimental.pallas import tpu as pltpu


def _point_line_distance_kernel(pts_ref, mask_ref, o_ref, *, dims: int):
    # pts_ref: (3*D, TN) f32  -- rows [0:D]=p1, [D:2D]=p2, [2D:3D]=p3
    # mask_ref: (1, TN) f32   -- pre-combined 0/1 mask
    pts = pts_ref[...]
    p1 = pts[0:dims]
    p2 = pts[dims:2 * dims]
    p3 = pts[2 * dims:3 * dims]

    def dist(x, y):
        d = x - y
        return jnp.sqrt(jnp.sum(d * d, axis=0, keepdims=True))  # (1, TN)

    # DistanceRepresentation.distance() on each pair
    a = dist(p1, p2)   # |p1 - p2|
    b = dist(p2, p3)   # |p2 - p3|  (the line segment length)
    c = dist(p1, p3)   # |p1 - p3|

    # Heron's formula
    s = (a + b + c) * 0.5
    squared = s * (s - a) * (s - b) * (s - c)
    area = jnp.sqrt(squared)          # NaN for slightly-negative `squared` (matches torch)
    distance = (area * 2.0) / b       # 0/0 -> NaN (zeroed below), x/0 -> inf (kept, like torch)

    # MaskedTensor.fix_nan(): NaN -> 0 (keeps +/-inf, like torch)
    distance = jnp.where(jnp.isnan(distance), jnp.zeros_like(distance), distance)

    # MaskedTensor.zero_filled(): multiply by combined mask (AND over p1/p2/p3 masks, over Dims)
    o_ref[...] = distance * mask_ref[...]


def point_line_distance(p1, p2, p3, m1, m2, m3, *, block_n=8192):
    """p*: (Points, Batch, Len, Dims) float; m*: same shape, 0/1 mask.
    Returns (Points, Batch, Len) float32."""
    P, B, L, D = p1.shape
    N = P * B * L

    # Lane tiling: pad N up to a multiple of 128, cap the tile at the problem
    # size, then pad to a whole number of tiles.
    n_pad128 = pl.cdiv(N, 128) * 128
    bn = min(block_n, n_pad128)
    n_pad = pl.cdiv(n_pad128, bn) * bn
    grid = n_pad // bn

    # --- wrapper prep: one stack + one transpose + one pad for the points ---
    pts = jnp.stack([p1, p2, p3], axis=0).astype(jnp.float32)   # (3, P, B, L, D)
    pts = pts.reshape(3, N, D)
    pts = jnp.swapaxes(pts, 1, 2).reshape(3 * D, N)             # (3*D, N), lane-dense
    pts = jnp.pad(pts, ((0, 0), (0, n_pad - N)))

    # --- pre-combine masks: AND over the three masks and over Dims -> (1, N) ---
    mask = (m1.astype(jnp.float32) * m2.astype(jnp.float32) * m3.astype(jnp.float32))
    mask = jnp.prod(mask, axis=-1).reshape(1, N)
    mask = jnp.pad(mask, ((0, 0), (0, n_pad - N)))

    # VMEM budget: double-buffered input + output tiles (sublane-padded to 8).
    def _rows8(r):
        return ((r + 7) // 8) * 8
    tile_bytes = (_rows8(3 * D) + _rows8(1) + _rows8(1)) * bn * 4
    vmem_bytes = int(min(64 * 1024 * 1024, max(4 * tile_bytes, 16 * 1024 * 1024)))

    kernel = functools.partial(_point_line_distance_kernel, dims=D)

    out = pl.pallas_call(
        kernel,
        out_shape=jax.ShapeDtypeStruct((1, n_pad), jnp.float32),
        grid_spec=pltpu.PrefetchScalarGridSpec(
            num_scalar_prefetch=0,
            grid=(grid,),
            in_specs=[
                pl.BlockSpec((3 * D, bn), lambda i: (0, i)),
                pl.BlockSpec((1, bn), lambda i: (0, i)),
            ],
            out_specs=pl.BlockSpec((1, bn), lambda i: (0, i)),
        ),
        compiler_params=pltpu.CompilerParams(
            dimension_semantics=("parallel",),
            vmem_limit_bytes=vmem_bytes,
        ),
    )(pts, mask)

    return out[0, :N].reshape(P, B, L)


def _reference(p1, p2, p3, m1, m2, m3):
    # Pure-JAX reference mirroring the PyTorch module semantics.
    def dist(x, y):
        return jnp.sqrt(jnp.sum((x - y) ** 2, axis=-1))
    a, b, c = dist(p1, p2), dist(p2, p3), dist(p1, p3)
    s = (a + b + c) / 2
    area = jnp.sqrt(s * (s - a) * (s - b) * (s - c))
    d = area * 2 / b
    d = jnp.where(jnp.isnan(d), 0.0, d)
    mask = jnp.prod(m1 * m2 * m3, axis=-1)
    return d * mask


def _run_case(key, shape, block_n):
    k1, k2, k3, km1, km2, km3 = jax.random.split(key, 6)
    p1 = jax.random.normal(k1, shape, jnp.float32)
    p2 = jax.random.normal(k2, shape, jnp.float32)
    p3 = jax.random.normal(k3, shape, jnp.float32)
    m1 = jax.random.bernoulli(km1, 0.9, shape).astype(jnp.float32)
    m2 = jax.random.bernoulli(km2, 0.9, shape).astype(jnp.float32)
    m3 = jax.random.bernoulli(km3, 0.9, shape).astype(jnp.float32)

    out = point_line_distance(p1, p2, p3, m1, m2, m3, block_n=block_n)
    out = jax.block_until_ready(out)

    expected = _reference(p1, p2, p3, m1, m2, m3)
    assert out.shape == shape[:3], out.shape
    assert bool(jnp.allclose(out, expected, atol=1e-5, rtol=1e-5)), "mismatch vs reference"


if __name__ == "__main__":
    key = jax.random.PRNGKey(0)
    k_small, k_multi = jax.random.split(key, 2)

    # Small shape consistent with the module docstring (Points, Batch, Len, Dims).
    _run_case(k_small, (5, 2, 8, 3), block_n=8192)

    # Slightly larger shape that forces a multi-step ("parallel") grid.
    _run_case(k_multi, (30, 4, 64, 3), block_n=1024)

    print("KERNEL_OK")
</pallas_src>

<mosaic_0001>
module attributes {stable_mosaic.version = 11 : i64} {
  func.func @_point_line_distance_kernel(%arg0: i32, %arg1: memref<9x128xf32, #tpu.memory_space<vmem>>, %arg2: memref<1x128xf32, #tpu.memory_space<vmem>>, %arg3: memref<1x128xf32, #tpu.memory_space<vmem>>) attributes {dimension_semantics = [#tpu.dimension_semantics<parallel>], iteration_bounds = array<i64: 1>, scalar_prefetch = 0 : i64, scratch_operands = 0 : i64, tpu.core_type = #tpu.core_type<tc>, window_params = [{transform_indices = @transform_0, window_bounds = array<i64: 9, 128>}, {transform_indices = @transform_1, window_bounds = array<i64: 1, 128>}, {transform_indices = @transform_2, window_bounds = array<i64: 1, 128>}]} {
    %c0 = arith.constant 0 : index
    %c0_0 = arith.constant 0 : index
    %0 = vector.load %arg1[%c0, %c0_0] : memref<9x128xf32, #tpu.memory_space<vmem>>, vector<9x128xf32>
    %1 = vector.extract_strided_slice %0 {offsets = [0, 0], sizes = [3, 128], strides = [1, 1]} : vector<9x128xf32> to vector<3x128xf32>
    %2 = vector.extract_strided_slice %0 {offsets = [3, 0], sizes = [3, 128], strides = [1, 1]} : vector<9x128xf32> to vector<3x128xf32>
    %3 = vector.extract_strided_slice %0 {offsets = [6, 0], sizes = [3, 128], strides = [1, 1]} : vector<9x128xf32> to vector<3x128xf32>
    %4 = arith.subf %1, %2 : vector<3x128xf32>
    %5 = arith.mulf %4, %4 : vector<3x128xf32>
    %cst = arith.constant dense<0.000000e+00> : vector<128xf32>
    %6 = vector.multi_reduction <add>, %5, %cst [0] : vector<3x128xf32> to vector<128xf32>
    %7 = vector.shape_cast %6 : vector<128xf32> to vector<1x128xf32>
    %8 = math.sqrt %7 : vector<1x128xf32>
    %9 = arith.subf %2, %3 : vector<3x128xf32>
    %10 = arith.mulf %9, %9 : vector<3x128xf32>
    %cst_1 = arith.constant dense<0.000000e+00> : vector<128xf32>
    %11 = vector.multi_reduction <add>, %10, %cst_1 [0] : vector<3x128xf32> to vector<128xf32>
    %12 = vector.shape_cast %11 : vector<128xf32> to vector<1x128xf32>
    %13 = math.sqrt %12 : vector<1x128xf32>
    %14 = arith.subf %1, %3 : vector<3x128xf32>
    %15 = arith.mulf %14, %14 : vector<3x128xf32>
    %cst_2 = arith.constant dense<0.000000e+00> : vector<128xf32>
    %16 = vector.multi_reduction <add>, %15, %cst_2 [0] : vector<3x128xf32> to vector<128xf32>
    %17 = vector.shape_cast %16 : vector<128xf32> to vector<1x128xf32>
    %18 = math.sqrt %17 : vector<1x128xf32>
    %19 = arith.addf %8, %13 : vector<1x128xf32>
    %20 = arith.addf %19, %18 : vector<1x128xf32>
    %cst_3 = arith.constant 5.000000e-01 : f32
    %21 = vector.broadcast %cst_3 : f32 to vector<1x128xf32>
    %22 = arith.mulf %20, %21 : vector<1x128xf32>
    %23 = arith.subf %22, %8 : vector<1x128xf32>
    %24 = arith.mulf %22, %23 : vector<1x128xf32>
    %25 = arith.subf %22, %13 : vector<1x128xf32>
    %26 = arith.mulf %24, %25 : vector<1x128xf32>
    %27 = arith.subf %22, %18 : vector<1x128xf32>
    %28 = arith.mulf %26, %27 : vector<1x128xf32>
    %29 = math.sqrt %28 : vector<1x128xf32>
    %cst_4 = arith.constant 2.000000e+00 : f32
    %30 = vector.broadcast %cst_4 : f32 to vector<1x128xf32>
    %31 = arith.mulf %29, %30 : vector<1x128xf32>
    %32 = arith.divf %31, %13 : vector<1x128xf32>
    %33 = arith.cmpf one, %32, %32 : vector<1x128xf32>
    %cst_5 = arith.constant 0.000000e+00 : f32
    %34 = vector.broadcast %cst_5 : f32 to vector<1x128xf32>
    %35 = arith.select %33, %34, %32 : vector<1x128xi1>, vector<1x128xf32>
    %c0_6 = arith.constant 0 : index
    %c0_7 = arith.constant 0 : index
    %36 = vector.load %arg2[%c0_6, %c0_7] : memref<1x128xf32, #tpu.memory_space<vmem>>, vector<1x128xf32>
    %37 = arith.mulf %35, %36 : vector<1x128xf32>
    %c0_8 = arith.constant 0 : index
    %c0_9 = arith.constant 0 : index
    %38 = vector.load %arg3[%c0_8, %c0_9] : memref<1x128xf32, #tpu.memory_space<vmem>>, vector<1x128xf32>
    tpu.vector_store %arg3[%c0_8, %c0_9], %37 {strides = array<i32>} : memref<1x128xf32, #tpu.memory_space<vmem>>, vector<1x128xf32>,
    return
  }
  func.func @transform_0(%arg0: i32) -> (i32, i32) {
    %c0_i32 = arith.constant 0 : i32
    %c0_i32_0 = arith.constant 0 : i32
    return %c0_i32, %arg0 : i32, i32
  }
  func.func @transform_1(%arg0: i32) -> (i32, i32) {
    %c0_i32 = arith.constant 0 : i32
    %c0_i32_0 = arith.constant 0 : i32
    return %c0_i32, %arg0 : i32, i32
  }
  func.func @transform_2(%arg0: i32) -> (i32, i32) {
    %c0_i32 = arith.constant 0 : i32
    %c0_i32_0 = arith.constant 0 : i32
    return %c0_i32, %arg0 : i32, i32
  }
}

</mosaic_0001>

<llo_original>
// kernel: tpu_custom_call.1
$region0: #{tpu_custom_call.1}
  #allocation0 [shape = 'u32[]', space=smem, size = 0x4, offset = 0x4, fixed_abs, tag = 'smem constant byte address 0x4 - core index']
  #allocation1 [shape = 'u32[144,128]{1,0:T(1,128)}', space=vmem, size = 0x12000, scoped, tag = 'internal scratch']
  %s0 = inlined_call_operand.hbm [shape: f32[9,128], index: 0, kind: input, shape index: {}]
  %s1 = inlined_call_operand.vmem [shape: f32[1,128], index: 1, kind: input, shape index: {}]
  %s2 = inlined_call_operand.hbm [shape: f32[1,128], index: 2, kind: output, shape index: {}]
  %s3 = sld [smem:[#allocation0]]
  $region22: #{tpu_custom_call.1} parent=0
    _
  %s5 = ssub.s32 1, %s3
  %s6 = scalar_select 0, %s5, %s3
  $region1: #{tpu_custom_call.1} parent=0
    #allocation2 [shape = 'u8[8192]{0}', space=vmem, size = 0x2000, scoped, tag = 'input window, operand 0, single buffered']
    #allocation3 [shape = 's32[1]{0}', space=sflag, size = 0x4, scoped, tag = 'scoped memory for tpu_custom_call.1']
    #allocation4 [shape = 's32[1]{0}', space=sflag, size = 0x4, scoped, tag = 'scoped memory for tpu_custom_call.1']
    #allocation5 [shape = 'u8[512]{0}', space=vmem, size = 0x400, scoped, tag = 'output window, operand 0, single buffered']
    %7 = vsyncpa [#allocation3], 0
    %8 = vsyncpa [#allocation4], 0
    // Predicated region
    $region2: #{tpu_custom_call.1} parent=1 // pred_check
      _
    $region3: #{tpu_custom_call.1} parent=1 // pred_check_branch
      %10 = sbr.rel (0) target = $region5
    $region4: #{tpu_custom_call.1} parent=1 // pred_region
      %s12 = ssub.s32 256, 256
      %13 = vsyncadd [#allocation3], %s12
      %s14 = sshll.u32 [#allocation2], 4
      %s15 = int_to_ptr.vmem [resolvable:$true] %s14
      %20 = dma.hbm_to_vmem [thread:$0]  %s0, 256, %s15, [#allocation3], 128, 128, 8
    $region5: #{tpu_custom_call.1} parent=1 // pred_fallthru
      _
    // Predicated region
    $region6: #{tpu_custom_call.1} parent=1 // pred_check
      _
    $region7: #{tpu_custom_call.1} parent=1 // pred_check_branch
      %22 = sbr.rel (0) target = $region9
    $region8: #{tpu_custom_call.1} parent=1 // pred_region
      _
    $region9: #{tpu_custom_call.1} parent=1 // pred_fallthru
      _
    // Predicated region
    $region10: #{tpu_custom_call.1} parent=1 // pred_check
      _
    $region11: #{tpu_custom_call.1} parent=1 // pred_check_branch
      %24 = sbr.rel (0) target = $region13
    $region12: #{tpu_custom_call.1} parent=1 // pred_region
      %25 = dma.done [#allocation3], 256
    $region13: #{tpu_custom_call.1} parent=1 // pred_fallthru
      _
    %v26 = vld [vmem:[#allocation2] sm:$0xff]
    %v27 = vld [vmem:[#allocation2 + $0x8] sm:$0x1]
    %v29 = vrot.slane %v26, 3
    %v31 = vsub.f32 %v26, %v29
    %v32 = vmul.f32 %v31, %v31
    %vm33 = vcmask 1042432
    %v34 = vsel %vm33, %v32, 0.0
    %v35 = vrot.slane %v34, 4
    %v36 = vadd.f32 %v34, %v35
    %v37 = vrot.slane %v36, 2
    %v38 = vadd.f32 %v36, %v37
    %v39 = vrot.slane %v38, 1
    %v40 = vadd.f32 %v38, %v39
    %v41 = vrsqrt.pop %v40
    %v42 = vmul.f32 %v40, %v41
    %vm43 = vcmp.eq.f32.partialorder %v40, inf
    %v44 = vsel %vm43, %v40, %v42
    %vm45 = vcmp.eq.f32.partialorder %v40, 0.0
    %v46 = vand.u32 %v40, 2147483648
    %v47 = vsel %vm45, %v46, %v44
    %vm49 = vcmask 1044480
    %v50 = vrot.slane %v27, 3
    %v51 = vsel %vm49, %v29, %v50
    %v53 = vsub.f32 %v26, %v51
    %v54 = vmul.f32 %v53, %v53
    %v56 = vrot.slane %v54, 3
    %v58 = vsel %vm33, %v56, 0.0
    %v59 = vrot.slane %v58, 4
    %v60 = vadd.f32 %v58, %v59
    %v61 = vrot.slane %v60, 2
    %v62 = vadd.f32 %v60, %v61
    %v63 = vrot.slane %v62, 1
    %v64 = vadd.f32 %v62, %v63
    %v65 = vrsqrt.pop %v64
    %v66 = vmul.f32 %v64, %v65
    %vm67 = vcmp.eq.f32.partialorder %v64, inf
    %v68 = vsel %vm67, %v64, %v66
    %vm69 = vcmp.eq.f32.partialorder %v64, 0.0
    %v70 = vand.u32 %v64, 2147483648
    %v71 = vsel %vm69, %v70, %v68
    %vm72 = vcmask 1041408
    %v73 = vrot.slane %v26, 6
    %v74 = vrot.slane %v27, 6
    %v75 = vsel %vm72, %v73, %v74
    %v77 = vsub.f32 %v26, %v75
    %v78 = vmul.f32 %v77, %v77
    %v79 = vsel %vm33, %v78, 0.0
    %v80 = vrot.slane %v79, 4
    %v81 = vadd.f32 %v79, %v80
    %v82 = vrot.slane %v81, 2
    %v83 = vadd.f32 %v81, %v82
    %v84 = vrot.slane %v83, 1
    %v85 = vadd.f32 %v83, %v84
    %v86 = vrsqrt.pop %v85
    %v87 = vmul.f32 %v85, %v86
    %vm88 = vcmp.eq.f32.partialorder %v85, inf
    %v89 = vsel %vm88, %v85, %v87
    %vm90 = vcmp.eq.f32.partialorder %v85, 0.0
    %v91 = vand.u32 %v85, 2147483648
    %v92 = vsel %vm90, %v91, %v89
    %v93 = vadd.f32 %v47, %v71
    %v94 = vadd.f32 %v93, %v92
    %v95 = vmul.f32 %v94, 0.5
    %v96 = vsub.f32 %v95, %v47
    %v97 = vmul.f32 %v95, %v96
    %v98 = vsub.f32 %v95, %v71
    %v99 = vmul.f32 %v97, %v98
    %v100 = vsub.f32 %v95, %v92
    %v101 = vmul.f32 %v99, %v100
    %v102 = vrsqrt.pop %v101
    %v103 = vmul.f32 %v101, %v102
    %vm104 = vcmp.eq.f32.partialorder %v101, inf
    %v105 = vsel %vm104, %v101, %v103
    %vm106 = vcmp.eq.f32.partialorder %v101, 0.0
    %v107 = vand.u32 %v101, 2147483648
    %v108 = vsel %vm106, %v107, %v105
    %v109 = vmul.f32 %v108, 2.0
    %v110 = vrcp.pop %v71
    %v111 = vmul.f32 %v109, %v110
    %vm112 = vcmp.ne.f32.partialorder %v111, %v111
    %v113 = vsel %vm112, 0.0, %v111
    %v114 = vld [vmem:[%s1] sm:$0x1]
    %v115 = vmul.f32 %v113, %v114
    %116 = vst [vmem:[#allocation5] sm:$0x1] %v115
    // Predicated region
    $region14: #{tpu_custom_call.1} parent=1 // pred_check
      _
    $region15: #{tpu_custom_call.1} parent=1 // pred_check_branch
      %118 = sbr.rel (0) target = $region17
    $region16: #{tpu_custom_call.1} parent=1 // pred_region
      %s120 = ssub.s32 16, 16
      %121 = vsyncadd [#allocation4], %s120
      %s123 = sshll.u32 [#allocation5], 4
      %s124 = int_to_ptr.vmem [resolvable:$true] %s123
      %126 = dma.vmem_to_hbm [thread:$0]  %s124, 16, %s2, [#allocation4]
    $region17: #{tpu_custom_call.1} parent=1 // pred_fallthru
      _
    // Predicated region
    $region18: #{tpu_custom_call.1} parent=1 // pred_check
      _
    $region19: #{tpu_custom_call.1} parent=1 // pred_check_branch
      %128 = sbr.rel (0) target = $region21
    $region20: #{tpu_custom_call.1} parent=1 // pred_region
      %129 = dma.done [#allocation4], 16
    $region21: #{tpu_custom_call.1} parent=1 // pred_fallthru
      _
    %130 = vsyncpa [#allocation3], 1
    %131 = vsyncpa [#allocation4], 1

</llo_original>
